<compile_context>
chip_gen: v6e
topology: v6e:2x2x1
jax: 0.10.0
libtpu: 0.0.40
codegen_flags: <defaults>
</compile_context>

<pallas_src>
import functools

import jax
import jax.numpy as jnp
import numpy as np
from jax.experimental import pallas as pl
from jax.experimental.pallas import tpu as pltpu


def _mbstd_kernel(x_ref, o_ref, *, G, C, F, HW, eps, inv_chw, inv_g):
    """One TM-wide chunk of group positions per grid step.

    x_ref : (G, TM, C*HW)        G group members per position, lane axis = C*HW
    o_ref : (G, TM, (C+F)*HW)    pass-through channels + appended std feature maps
    """
    CHW = C * HW
    cHW = (C // F) * HW
    TM = x_ref.shape[1]

    # ---- Pass 1: copy-through (input dtype, no round-trip) + f32 group mean.
    x0 = x_ref[0]                                       # (TM, C*HW)
    o_ref[0, :, :CHW] = x0
    mean_g = x0.astype(jnp.float32)
    for g in range(1, G):
        xg = x_ref[g]
        o_ref[g, :, :CHW] = xg
        mean_g = mean_g + xg.astype(jnp.float32)
    mean_g = mean_g * inv_g                             # (TM, C*HW)

    # ---- Pass 2: variance over the (small, static) group axis, two-pass form.
    var = jnp.zeros_like(mean_g)
    for g in range(G):
        d = x_ref[g].astype(jnp.float32) - mean_g
        var = var + d * d
    var = var * inv_g                                   # (TM, C*HW)

    std = jnp.sqrt(var + eps)                           # (TM, C*HW)

    # ---- Per-(m, f) statistic: mean of std over (c, H, W), via static lane slices.
    y_maps = []
    for f in range(F):
        stat = jnp.sum(std[:, f * cHW:(f + 1) * cHW], axis=-1, keepdims=True) * inv_chw
        y_maps.append(jnp.broadcast_to(stat, (TM, HW)).astype(o_ref.dtype))

    # ---- Append the F std feature maps (identical across the group axis).
    for g in range(G):
        for f in range(F):
            o_ref[g, :, CHW + f * HW: CHW + (f + 1) * HW] = y_maps[f]


def _choose_tm(M, per_m_bytes):
    """Tile of the group-position (M) axis.

    Largest tile that divides M, is a multiple of 8 (or the full extent), and
    keeps a double-buffered in+out block pair comfortably under v5e's 16 MiB
    scoped-VMEM default.  When there is plenty of work we keep >=2 grid steps
    so both v7x TensorCores stay busy; tiny problems collapse to one step.
    """
    budget = 4 << 20
    if M <= 8:
        return M
    cands = [d for d in range(8, M + 1, 8) if M % d == 0 and d * per_m_bytes <= budget]
    if not cands:
        return M
    tm = max(cands)
    if tm == M and M % 16 == 0 and (M // 2) * per_m_bytes >= (512 << 10):
        tm = M // 2                                     # keep 2 parallel steps for v7x
    return tm


class MinibatchStdLayerPallas:
    """Pallas port of MinibatchStdLayer (forward only)."""

    def __init__(self, group_size, num_channels=1):
        self.group_size = group_size
        self.num_channels = num_channels

    def __call__(self, x):
        N, C, H, W = x.shape
        G = N if self.group_size is None else min(int(self.group_size), N)
        F = self.num_channels
        if N % G != 0:
            raise ValueError("batch size must be divisible by the group size")
        if C % F != 0:
            raise ValueError("channels must be divisible by num_channels")
        M = N // G
        c = C // F
        HW = H * W
        CHW = C * HW

        # (N, C, H, W) -> (G, M, C*HW): pure row-major reshape; sample n = g*M + m
        # is the same group assignment as torch's x.reshape(G, -1, F, c, H, W).
        x3 = x.reshape(G, M, CHW)

        itemsize = jnp.dtype(x.dtype).itemsize
        per_m_bytes = G * (2 * C + F) * HW * itemsize      # in + out bytes per m
        TM = _choose_tm(M, per_m_bytes)

        kernel = functools.partial(
            _mbstd_kernel, G=G, C=C, F=F, HW=HW,
            eps=1e-8, inv_chw=1.0 / float(c * HW), inv_g=1.0 / float(G),
        )

        compiler_kwargs = {"dimension_semantics": ("parallel",)}
        # Double-buffered in+out block pair; raise the scoped-VMEM limit only
        # when the default (16 MiB on v5e) would be tight.
        needed = 2 * TM * per_m_bytes + (2 << 20)
        if needed > (12 << 20):
            compiler_kwargs["vmem_limit_bytes"] = int(min(needed, 56 << 20))

        out = pl.pallas_call(
            kernel,
            out_shape=jax.ShapeDtypeStruct((G, M, (C + F) * HW), x.dtype),
            grid_spec=pltpu.PrefetchScalarGridSpec(
                num_scalar_prefetch=0,
                grid=(M // TM,),
                in_specs=[
                    pl.BlockSpec((G, TM, CHW), lambda m: (0, m, 0)),
                ],
                out_specs=pl.BlockSpec((G, TM, (C + F) * HW), lambda m: (0, m, 0)),
            ),
            compiler_params=pltpu.CompilerParams(**compiler_kwargs),
        )(x3)

        return out.reshape(N, C + F, H, W)


def _reference(x, group_size, num_channels):
    """Pure-JAX mirror of the torch forward."""
    N, C, H, W = x.shape
    G = N if group_size is None else min(int(group_size), N)
    F = num_channels
    c = C // F
    y = x.reshape(G, -1, F, c, H, W).astype(jnp.float32)
    y = y - jnp.mean(y, axis=0)
    y = jnp.mean(y * y, axis=0)
    y = jnp.sqrt(y + 1e-8)
    y = jnp.mean(y, axis=(2, 3, 4))            # (M, F)
    y = y.reshape(-1, F, 1, 1)
    y = jnp.tile(y, (G, 1, H, W))              # (N, F, H, W)
    return jnp.concatenate([x, y.astype(x.dtype)], axis=1)


if __name__ == "__main__":
    key = jax.random.PRNGKey(0)

    # Case 1: standard config (F = 1).
    N, C, H, W = 4, 4, 16, 16
    group_size, num_channels = 2, 1
    x = jax.random.normal(key, (N, C, H, W), dtype=jnp.float32)
    layer = MinibatchStdLayerPallas(group_size=group_size, num_channels=num_channels)
    y = jax.block_until_ready(layer(x))
    y_ref = _reference(x, group_size, num_channels)
    np.testing.assert_allclose(np.asarray(y), np.asarray(y_ref), rtol=1e-5, atol=1e-5)
    assert y.shape == (N, C + num_channels, H, W)

    # Case 2: multi-channel statistic path (F = 2, larger group).
    k2 = jax.random.PRNGKey(1)
    N2, C2, H2, W2 = 8, 8, 16, 16
    gs2, nc2 = 4, 2
    x2 = jax.random.normal(k2, (N2, C2, H2, W2), dtype=jnp.float32)
    layer2 = MinibatchStdLayerPallas(group_size=gs2, num_channels=nc2)
    y2 = jax.block_until_ready(layer2(x2))
    y2_ref = _reference(x2, gs2, nc2)
    np.testing.assert_allclose(np.asarray(y2), np.asarray(y2_ref), rtol=1e-5, atol=1e-5)
    assert y2.shape == (N2, C2 + nc2, H2, W2)

    print("KERNEL_OK")
</pallas_src>

<mosaic_0001>
module attributes {stable_mosaic.version = 11 : i64} {
  func.func @_mbstd_kernel(%arg0: i32, %arg1: memref<2x2x1024xf32, #tpu.memory_space<vmem>>, %arg2: memref<2x2x1280xf32, #tpu.memory_space<vmem>>) attributes {dimension_semantics = [#tpu.dimension_semantics<parallel>], iteration_bounds = array<i64: 1>, scalar_prefetch = 0 : i64, scratch_operands = 0 : i64, tpu.core_type = #tpu.core_type<tc>, window_params = [{transform_indices = @transform_0, window_bounds = array<i64: 2, 2, 1024>}, {transform_indices = @transform_1, window_bounds = array<i64: 2, 2, 1280>}]} {
    %c0 = arith.constant 0 : index
    %c0_0 = arith.constant 0 : index
    %c0_1 = arith.constant 0 : index
    %0 = vector.load %arg1[%c0, %c0_0, %c0_1] : memref<2x2x1024xf32, #tpu.memory_space<vmem>>, vector<1x2x1024xf32>
    %1 = vector.shape_cast %0 : vector<1x2x1024xf32> to vector<2x1024xf32>
    %c0_2 = arith.constant 0 : index
    %c0_3 = arith.constant 0 : index
    %c0_4 = arith.constant 0 : index
    %2 = vector.load %arg2[%c0_2, %c0_3, %c0_4] : memref<2x2x1280xf32, #tpu.memory_space<vmem>>, vector<1x2x1024xf32>
    %3 = vector.shape_cast %2 : vector<1x2x1024xf32> to vector<2x1024xf32>
    %4 = vector.shape_cast %1 : vector<2x1024xf32> to vector<1x2x1024xf32>
    tpu.vector_store %arg2[%c0_2, %c0_3, %c0_4], %4 {strides = array<i32>} : memref<2x2x1280xf32, #tpu.memory_space<vmem>>, vector<1x2x1024xf32>,
    %c1 = arith.constant 1 : index
    %c0_5 = arith.constant 0 : index
    %c0_6 = arith.constant 0 : index
    %5 = vector.load %arg1[%c1, %c0_5, %c0_6] : memref<2x2x1024xf32, #tpu.memory_space<vmem>>, vector<1x2x1024xf32>
    %6 = vector.shape_cast %5 : vector<1x2x1024xf32> to vector<2x1024xf32>
    %c1_7 = arith.constant 1 : index
    %c0_8 = arith.constant 0 : index
    %c0_9 = arith.constant 0 : index
    %7 = vector.load %arg2[%c1_7, %c0_8, %c0_9] : memref<2x2x1280xf32, #tpu.memory_space<vmem>>, vector<1x2x1024xf32>
    %8 = vector.shape_cast %7 : vector<1x2x1024xf32> to vector<2x1024xf32>
    %9 = vector.shape_cast %6 : vector<2x1024xf32> to vector<1x2x1024xf32>
    tpu.vector_store %arg2[%c1_7, %c0_8, %c0_9], %9 {strides = array<i32>} : memref<2x2x1280xf32, #tpu.memory_space<vmem>>, vector<1x2x1024xf32>,
    %10 = arith.addf %1, %6 : vector<2x1024xf32>
    %cst = arith.constant 5.000000e-01 : f32
    %11 = vector.broadcast %cst : f32 to vector<2x1024xf32>
    %12 = arith.mulf %10, %11 : vector<2x1024xf32>
    %cst_10 = arith.constant 0.000000e+00 : f32
    %13 = vector.broadcast %cst_10 : f32 to vector<2x1024xf32>
    %c0_11 = arith.constant 0 : index
    %c0_12 = arith.constant 0 : index
    %c0_13 = arith.constant 0 : index
    %14 = vector.load %arg1[%c0_11, %c0_12, %c0_13] : memref<2x2x1024xf32, #tpu.memory_space<vmem>>, vector<1x2x1024xf32>
    %15 = vector.shape_cast %14 : vector<1x2x1024xf32> to vector<2x1024xf32>
    %16 = arith.subf %15, %12 : vector<2x1024xf32>
    %17 = arith.mulf %16, %16 : vector<2x1024xf32>
    %18 = arith.addf %13, %17 : vector<2x1024xf32>
    %c1_14 = arith.constant 1 : index
    %c0_15 = arith.constant 0 : index
    %c0_16 = arith.constant 0 : index
    %19 = vector.load %arg1[%c1_14, %c0_15, %c0_16] : memref<2x2x1024xf32, #tpu.memory_space<vmem>>, vector<1x2x1024xf32>
    %20 = vector.shape_cast %19 : vector<1x2x1024xf32> to vector<2x1024xf32>
    %21 = arith.subf %20, %12 : vector<2x1024xf32>
    %22 = arith.mulf %21, %21 : vector<2x1024xf32>
    %23 = arith.addf %18, %22 : vector<2x1024xf32>
    %cst_17 = arith.constant 5.000000e-01 : f32
    %24 = vector.broadcast %cst_17 : f32 to vector<2x1024xf32>
    %25 = arith.mulf %23, %24 : vector<2x1024xf32>
    %cst_18 = arith.constant 9.99999993E-9 : f32
    %26 = vector.broadcast %cst_18 : f32 to vector<2x1024xf32>
    %27 = arith.addf %25, %26 : vector<2x1024xf32>
    %28 = math.sqrt %27 : vector<2x1024xf32>
    %cst_19 = arith.constant dense<0.000000e+00> : vector<2xf32>
    %29 = vector.multi_reduction <add>, %28, %cst_19 [1] : vector<2x1024xf32> to vector<2xf32>
    %30 = vector.shape_cast %29 : vector<2xf32> to vector<2x1xf32>
    %cst_20 = arith.constant 9.765625E-4 : f32
    %31 = vector.broadcast %cst_20 : f32 to vector<2x1xf32>
    %32 = arith.mulf %30, %31 : vector<2x1xf32>
    %33 = vector.shape_cast %32 : vector<2x1xf32> to vector<2x1xf32>
    %34 = vector.broadcast %33 : vector<2x1xf32> to vector<2x256xf32>
    %c0_21 = arith.constant 0 : index
    %c0_22 = arith.constant 0 : index
    %c1024 = arith.constant 1024 : index
    %35 = vector.load %arg2[%c0_21, %c0_22, %c1024] : memref<2x2x1280xf32, #tpu.memory_space<vmem>>, vector<1x2x256xf32>
    %36 = vector.shape_cast %35 : vector<1x2x256xf32> to vector<2x256xf32>
    %37 = vector.shape_cast %34 : vector<2x256xf32> to vector<1x2x256xf32>
    tpu.vector_store %arg2[%c0_21, %c0_22, %c1024], %37 {strides = array<i32>} : memref<2x2x1280xf32, #tpu.memory_space<vmem>>, vector<1x2x256xf32>,
    %c1_23 = arith.constant 1 : index
    %c0_24 = arith.constant 0 : index
    %c1024_25 = arith.constant 1024 : index
    %38 = vector.load %arg2[%c1_23, %c0_24, %c1024_25] : memref<2x2x1280xf32, #tpu.memory_space<vmem>>, vector<1x2x256xf32>
    %39 = vector.shape_cast %38 : vector<1x2x256xf32> to vector<2x256xf32>
    %40 = vector.shape_cast %34 : vector<2x256xf32> to vector<1x2x256xf32>
    tpu.vector_store %arg2[%c1_23, %c0_24, %c1024_25], %40 {strides = array<i32>} : memref<2x2x1280xf32, #tpu.memory_space<vmem>>, vector<1x2x256xf32>,
    return
  }
  func.func @transform_0(%arg0: i32) -> (i32, i32, i32) {
    %c0_i32 = arith.constant 0 : i32
    %c0_i32_0 = arith.constant 0 : i32
    %c0_i32_1 = arith.constant 0 : i32
    return %c0_i32, %arg0, %c0_i32_0 : i32, i32, i32
  }
  func.func @transform_1(%arg0: i32) -> (i32, i32, i32) {
    %c0_i32 = arith.constant 0 : i32
    %c0_i32_0 = arith.constant 0 : i32
    %c0_i32_1 = arith.constant 0 : i32
    return %c0_i32, %arg0, %c0_i32_0 : i32, i32, i32
  }
}

</mosaic_0001>

<llo_original>
// kernel: tpu_custom_call.1
$region0: #{tpu_custom_call.1}
  #allocation0 [shape = 'u32[]', space=smem, size = 0x4, offset = 0x4, fixed_abs, tag = 'smem constant byte address 0x4 - core index']
  #allocation1 [shape = 'u32[144,128]{1,0:T(1,128)}', space=vmem, size = 0x12000, scoped, tag = 'internal scratch']
  %s0 = inlined_call_operand.hbm [shape: f32[2,2,1024], index: 0, kind: input, shape index: {}]
  %s1 = inlined_call_operand.hbm [shape: f32[2,2,1280], index: 1, kind: output, shape index: {}]
  %s2 = sld [smem:[#allocation0]]
  $region18: #{tpu_custom_call.1} parent=0
    _
  %s4 = ssub.s32 1, %s2
  %s5 = scalar_select 0, %s4, %s2
  $region1: #{tpu_custom_call.1} parent=0
    #allocation2 [shape = 'u8[16384]{0}', space=vmem, size = 0x4000, scoped, tag = 'input window, operand 0, single buffered']
    #allocation3 [shape = 's32[1]{0}', space=sflag, size = 0x4, scoped, tag = 'scoped memory for tpu_custom_call.1']
    #allocation4 [shape = 's32[1]{0}', space=sflag, size = 0x4, scoped, tag = 'scoped memory for tpu_custom_call.1']
    #allocation5 [shape = 'u8[20480]{0}', space=vmem, size = 0x5000, scoped, tag = 'output window, operand 0, single buffered']
    %6 = vsyncpa [#allocation3], 0
    %7 = vsyncpa [#allocation4], 0
    // Predicated region
    $region2: #{tpu_custom_call.1} parent=1 // pred_check
      _
    $region3: #{tpu_custom_call.1} parent=1 // pred_check_branch
      %9 = sbr.rel (0) target = $region5
    $region4: #{tpu_custom_call.1} parent=1 // pred_region
      %s11 = ssub.s32 512, 512
      %12 = vsyncadd [#allocation3], %s11
      %s13 = sshll.u32 [#allocation2], 4
      %s14 = int_to_ptr.vmem [resolvable:$true] %s13
      %19 = dma.hbm_to_vmem [thread:$0]  %s0, 512, %s14, [#allocation3], 256, 256, 16
    $region5: #{tpu_custom_call.1} parent=1 // pred_fallthru
      _
    // Predicated region
    $region6: #{tpu_custom_call.1} parent=1 // pred_check
      _
    $region7: #{tpu_custom_call.1} parent=1 // pred_check_branch
      %21 = sbr.rel (0) target = $region9
    $region8: #{tpu_custom_call.1} parent=1 // pred_region
      %22 = dma.done [#allocation3], 512
    $region9: #{tpu_custom_call.1} parent=1 // pred_fallthru
      _
    %v23 = vld [vmem:[#allocation2] sm:$0xff]
    %v24 = vld [vmem:[#allocation2 + $0x8] sm:$0xff]
    %25 = vst [vmem:[#allocation5] sm:$0xff] %v23
    %26 = vst [vmem:[#allocation5 + $0x8] sm:$0xff] %v24
    %s27 = scalar_lea.vmem [#allocation2], 16
    %v28 = vld [vmem:[%s27] sm:$0xff]
    %v29 = vld [vmem:[%s27 + $0x8] sm:$0xff]
    %s30 = scalar_lea.vmem [#allocation5], 20
    %31 = vst [vmem:[%s30] sm:$0xff] %v28
    %32 = vst [vmem:[%s30 + $0x8] sm:$0xff] %v29
    %v33 = vadd.f32 %v23, %v28
    %v34 = vadd.f32 %v24, %v29
    %v35 = vmul.f32 %v33, 0.5
    %v36 = vmul.f32 %v34, 0.5
    %v37 = vld [vmem:[#allocation2] sm:$0xff]
    %v38 = vld [vmem:[#allocation2 + $0x8] sm:$0xff]
    %v39 = vsub.f32 %v37, %v35
    %v40 = vsub.f32 %v38, %v36
    %v41 = vmul.f32 %v39, %v39
    %v42 = vmul.f32 %v40, %v40
    %v43 = vadd.f32 %v41, 0.0
    %v44 = vadd.f32 %v42, 0.0
    %v45 = vld [vmem:[%s27] sm:$0xff]
    %v46 = vld [vmem:[%s27 + $0x8] sm:$0xff]
    %v47 = vsub.f32 %v45, %v35
    %v48 = vsub.f32 %v46, %v36
    %v49 = vmul.f32 %v47, %v47
    %v50 = vmul.f32 %v48, %v48
    %v51 = vadd.f32 %v43, %v49
    %v52 = vadd.f32 %v44, %v50
    %v53 = vmul.f32 %v51, 0.5
    %v54 = vmul.f32 %v52, 0.5
    %v55 = vadd.f32 %v53, 1e-08
    %v56 = vadd.f32 %v54, 1e-08
    %v57 = vrsqrt.pop %v55
    %v58 = vmul.f32 %v55, %v57
    %vm59 = vcmp.eq.f32.partialorder %v55, inf
    %v60 = vsel %vm59, %v55, %v58
    %vm61 = vcmp.eq.f32.partialorder %v55, 0.0
    %v62 = vand.u32 %v55, 2147483648
    %v63 = vsel %vm61, %v62, %v60
    %v64 = vrsqrt.pop %v56
    %v65 = vmul.f32 %v56, %v64
    %vm66 = vcmp.eq.f32.partialorder %v56, inf
    %v67 = vsel %vm66, %v56, %v65
    %vm68 = vcmp.eq.f32.partialorder %v56, 0.0
    %v69 = vand.u32 %v56, 2147483648
    %v70 = vsel %vm68, %v69, %v67
    %v73 = vcombine.high %v63, %v63
    %v75 = vunpack.c.l.s4 1983009808
    %v76 = vunpack.c.0.s8 %v75
    %v77 = vlaneseq
    %v78 = vshrl.u32 %v77, 7
    %v79 = vsub.s32 %v76, %v78
    %v80 = vrot.slane %v63, %v79
    %v82 = vunpack.c.l.s4 1983009808
    %v83 = vunpack.c.0.s8 %v82
    %v84 = vlaneseq
    %v85 = vshrl.u32 %v84, 7
    %v86 = vsub.s32 %v83, %v85
    %v87 = vrot.slane %v73, %v86
    %v88 = vcombine.high %v80, %v80
    %v89 = vcombine.high %v87, %v87
    %v90 = vcombine.high %v70, %v70
    %v92 = vunpack.c.l.s4 1983009808
    %v93 = vunpack.c.0.s8 %v92
    %v94 = vlaneseq
    %v95 = vshrl.u32 %v94, 7
    %v96 = vsub.s32 %v93, %v95
    %v97 = vrot.slane %v70, %v96
    %v99 = vunpack.c.l.s4 1983009808
    %v100 = vunpack.c.0.s8 %v99
    %v101 = vlaneseq
    %v102 = vshrl.u32 %v101, 7
    %v103 = vsub.s32 %v100, %v102
    %v104 = vrot.slane %v90, %v103
    %v105 = vcombine.high %v97, %v97
    %v106 = vcombine.high %v104, %v104
    %vm115 = vcmask 1041408
    %v116 = vsel %vm115, %v80, 0.0
    %v117 = vsel %vm115, %v88, 0.0
    %v118 = vadd.f32 %v116, %v117
    %v119 = vsel %vm115, %v87, 0.0
    %v120 = vadd.f32 %v118, %v119
    %v121 = vsel %vm115, %v89, 0.0
    %v122 = vadd.f32 %v120, %v121
    %v123 = vsel %vm115, %v97, 0.0
    %v124 = vadd.f32 %v122, %v123
    %v125 = vsel %vm115, %v105, 0.0
    %v126 = vadd.f32 %v124, %v125
    %v127 = vsel %vm115, %v104, 0.0
    %v128 = vadd.f32 %v126, %v127
    %v129 = vsel %vm115, %v106, 0.0
    %v130 = vadd.f32 %v128, %v129
    %131 = vadd.xlane.f32.xlu0 %v130
    %v132 = vpop.xlane.xlu0 %131
    %v133 = vmul.f32 %v132, 0.0009765625
    %v136 = vunpack.c.l.s4 269488144
    %v137 = vunpack.c.0.s8 %v136
    %v138 = vlaneseq
    %v139 = vshrl.u32 %v138, 7
    %v140 = vsub.s32 %v137, %v139
    %v141 = vrot.slane %v133, %v140
    %143 = vst [vmem:[#allocation5 + $0x10] sm:$0xf] %v141
    %144 = vst [vmem:[%s30 + $0x10] sm:$0xf] %v141
    // Predicated region
    $region10: #{tpu_custom_call.1} parent=1 // pred_check
      _
    $region11: #{tpu_custom_call.1} parent=1 // pred_check_branch
      %146 = sbr.rel (0) target = $region13
    $region12: #{tpu_custom_call.1} parent=1 // pred_region
      %s148 = ssub.s32 640, 640
      %149 = vsyncadd [#allocation4], %s148
      %s150 = sshll.u32 [#allocation5], 4
      %s151 = int_to_ptr.vmem [resolvable:$true] %s150
      %156 = dma.vmem_to_hbm [thread:$0]  %s151, 640, %s1, [#allocation4], 320, 320, 20
    $region13: #{tpu_custom_call.1} parent=1 // pred_fallthru
      _
    // Predicated region
    $region14: #{tpu_custom_call.1} parent=1 // pred_check
      _
    $region15: #{tpu_custom_call.1} parent=1 // pred_check_branch
      %158 = sbr.rel (0) target = $region17
    $region16: #{tpu_custom_call.1} parent=1 // pred_region
      %159 = dma.done [#allocation4], 640
    $region17: #{tpu_custom_call.1} parent=1 // pred_fallthru
      _
    %160 = vsyncpa [#allocation3], 1
    %161 = vsyncpa [#allocation4], 1

</llo_original>
